<compile_context>
chip_gen: v6e
topology: v6e:2x2x1
jax: 0.10.0
libtpu: 0.0.40
codegen_flags: <defaults>
</compile_context>

<pallas_src>
import functools
import math

import jax
import jax.numpy as jnp
from jax.experimental import pallas as pl
from jax.experimental.pallas import tpu as pltpu


def _round_up(v: int, m: int) -> int:
    return ((v + m - 1) // m) * m


@functools.lru_cache(maxsize=1)
def _vmem_capacity_bytes() -> int:
    try:
        return int(pltpu.get_tpu_info().vmem_capacity_bytes)
    except Exception:
        return 64 * 1024 * 1024  # conservative fallback (v7x per-TC VMEM)


def _vmem_budget_bytes() -> int:
    # ~75% of per-core VMEM with >=12 MiB headroom:
    #   128 MiB parts (v5e/v6e) -> 96 MiB;  64 MiB parts (v7x) -> 48 MiB.
    cap = _vmem_capacity_bytes()
    return max(8 << 20, min(cap - (12 << 20), int(cap * 0.75)))


def _pick_tn(n: int, batch: int, per_lane_bytes: int, fixed_bytes: int,
             budget: int, tn_max: int) -> int:
    """Largest lane tile (multiple of 128) fitting the VMEM budget, with >=2
    total grid steps so both TensorCores on v7x are fed."""
    tn = min(tn_max, _round_up(n, 128))
    while tn > 128 and fixed_bytes + per_lane_bytes * tn > budget:
        tn = max(128, _round_up(tn // 2, 128))
    while tn > 128 and batch * pl.cdiv(n, tn) < 2:
        tn = max(128, _round_up(tn // 2, 128))
    return min(tn, n)  # full-extent block is always layout-legal


def _pick_tk(c1: int) -> int:
    """C1-chunk for the K grid axis.  Only split on exact 128-aligned divisors
    so a ragged last K block can never feed garbage into the accumulator."""
    if c1 <= 1024:
        return c1
    for cand in (1024, 896, 768, 640, 512, 384, 256, 128):
        if c1 % cand == 0:
            return cand
    # TODO(synk): zero-pad C1 in the wrapper when no 128-aligned divisor exists.
    return c1


def _bilinear_resize_matrix(n_in: int, n_out: int) -> jax.Array:
    """R (n_out, n_in) such that R @ v == bilinear resize of v along one axis
    (half-pixel centers, antialias=False == torch align_corners=False)."""
    eye = jnp.eye(n_in, dtype=jnp.float32)
    return jax.image.resize(eye, (n_out, n_in), method="linear", antialias=False)


# --------------------------------------------------------------------------
# Kernel 1: plain 1x1 conv (no resize), lane-dense GEMM with K accumulation.
# --------------------------------------------------------------------------
def _conv1x1_kernel(x_ref, w_ref, b_ref, o_ref, acc_ref):
    """x_ref: (TK, TN) f32/bf16   w_ref: (C2, TK) bf16   b_ref: (C2, 1) f32
    o_ref: (C2, TN)             acc_ref: (C2, TN) f32 scratch."""
    k = pl.program_id(2)

    @pl.when(k == 0)
    def _():
        acc_ref[...] = jnp.zeros_like(acc_ref)

    # Fused in-VMEM cast: activations arrive in their HBM dtype (f32), MXU
    # operands are bf16, accumulation is f32.
    acc_ref[...] += jnp.dot(w_ref[...], x_ref[...].astype(jnp.bfloat16),
                            preferred_element_type=jnp.float32)

    @pl.when(k == pl.num_programs(2) - 1)
    def _():
        o_ref[...] = (acc_ref[...] + b_ref[...]).astype(o_ref.dtype)


def conv1x1_nchw(x, w, b, *, out_dtype=jnp.bfloat16, tn_max=8192):
    """y[n, :, h, w] = W @ x[n, :, h, w] + bias  on NCHW input.
    x: (B, C1, H, W)  w: (C2, C1)  b: (C2,)  ->  (B, C2, H, W)."""
    B, C1, H, W = x.shape
    C2 = w.shape[0]
    N = H * W

    x3 = x.reshape(B, C1, N)                 # no-copy view; cast happens in-kernel
    w = w.astype(jnp.bfloat16)
    b2 = b.reshape(C2, 1).astype(jnp.float32)

    x_item = jnp.dtype(x3.dtype).itemsize
    o_item = jnp.dtype(out_dtype).itemsize
    tk = _pick_tk(C1)
    nk = pl.cdiv(C1, tk)

    budget = _vmem_budget_bytes()
    per_lane = 2 * tk * x_item + 2 * C2 * o_item + C2 * 4   # X, Y dbl-buf + acc
    fixed = 2 * C2 * tk * 2 + C2 * 4                        # W dbl-buf + bias
    tn = _pick_tn(N, B, per_lane, fixed, budget, tn_max)
    nj = pl.cdiv(N, tn)
    vmem_limit = int(min(_vmem_capacity_bytes(),
                         max(32 << 20, fixed + per_lane * tn + (8 << 20))))

    cost = pl.CostEstimate(
        flops=2 * B * N * C1 * C2,
        transcendentals=0,
        bytes_accessed=(B * N * C1 * x_item + C1 * C2 * 2
                        + B * N * C2 * o_item + C2 * 4))

    out = pl.pallas_call(
        _conv1x1_kernel,
        out_shape=jax.ShapeDtypeStruct((B, C2, N), out_dtype),
        grid_spec=pltpu.PrefetchScalarGridSpec(
            num_scalar_prefetch=0,
            grid=(B, nj, nk),
            in_specs=[
                pl.BlockSpec((None, tk, tn), lambda bi, j, k: (bi, k, j)),  # X
                pl.BlockSpec((C2, tk), lambda bi, j, k: (0, k)),            # W
                pl.BlockSpec((C2, 1), lambda bi, j, k: (0, 0)),             # bias
            ],
            out_specs=pl.BlockSpec((None, C2, tn), lambda bi, j, k: (bi, 0, j)),
            scratch_shapes=[pltpu.VMEM((C2, tn), jnp.float32)],
        ),
        compiler_params=pltpu.CompilerParams(
            dimension_semantics=("parallel", "parallel", "arbitrary"),
            vmem_limit_bytes=vmem_limit,
        ),
        cost_estimate=cost,
    )(x3, w, b2)
    # TODO(synk): when N is tiny (e.g. 14x14) block several batch images per
    # grid step to amortize the ~0.35us/step overhead.
    return out.reshape(B, C2, H, W)


# --------------------------------------------------------------------------
# Kernel 2: fused bilinear-resize + 1x1 conv.
#   Y[b] = (W @ X[b]) @ R^T + bias, with R = kron(Rh, Rw) the resize operator.
#   Conv runs on the SMALL spatial size; output stays lane-dense (H2*W2 lanes);
#   the upsampled activation never touches HBM.
# --------------------------------------------------------------------------
def _conv1x1_resize_kernel(x_ref, w_ref, rt_ref, b_ref, o_ref, z_ref):
    """x_ref: (C1, S1) f32   w_ref: (C2, C1) bf16   rt_ref: (S1, TN) bf16
    b_ref: (C2, 1) f32     o_ref: (C2, TN)        z_ref: (C2, S1) bf16 scratch."""
    @pl.when(pl.program_id(1) == 0)        # once per batch image
    def _():
        z = jnp.dot(w_ref[...], x_ref[...].astype(jnp.bfloat16),
                    preferred_element_type=jnp.float32)
        z_ref[...] = z.astype(jnp.bfloat16)

    acc = jnp.dot(z_ref[...], rt_ref[...], preferred_element_type=jnp.float32)
    o_ref[...] = (acc + b_ref[...]).astype(o_ref.dtype)


def _fused_resize_feasible(c1, c2, s1, s2, out_itemsize) -> bool:
    budget = _vmem_budget_bytes()
    per_lane = 2 * s1 * 2 + 2 * c2 * out_itemsize
    fixed = 2 * c1 * s1 * 4 + c2 * s1 * 2 + 2 * c2 * c1 * 2 + c2 * 4
    if fixed + per_lane * 128 > budget:
        return False
    return s1 * s2 * 2 <= 64 * 1024 * 1024   # don't build an absurd R in HBM


def conv1x1_resize_fused(x, w, b, rt, to_hw, *, out_dtype=jnp.bfloat16,
                         tn_max=8192):
    """x: (B, C1, H1, W1) f32, w: (C2, C1), b: (C2,), rt: (H1*W1, H2*W2) bf16."""
    B, C1, H1, W1 = x.shape
    C2 = w.shape[0]
    H2, W2 = to_hw
    S1, S2 = H1 * W1, H2 * W2

    x3 = x.reshape(B, C1, S1)               # no-copy view
    w = w.astype(jnp.bfloat16)
    rt = rt.astype(jnp.bfloat16)
    b2 = b.reshape(C2, 1).astype(jnp.float32)

    x_item = jnp.dtype(x3.dtype).itemsize
    o_item = jnp.dtype(out_dtype).itemsize
    budget = _vmem_budget_bytes()
    per_lane = 2 * S1 * 2 + 2 * C2 * o_item                 # R^T, Y double-buffered
    fixed = 2 * C1 * S1 * x_item + C2 * S1 * 2 + 2 * C2 * C1 * 2 + C2 * 4
    tn = _pick_tn(S2, B, per_lane, fixed, budget, tn_max)
    nj = pl.cdiv(S2, tn)
    vmem_limit = int(min(_vmem_capacity_bytes(),
                         max(32 << 20, fixed + per_lane * tn + (8 << 20))))

    cost = pl.CostEstimate(
        flops=2 * B * C2 * S1 * (C1 + S2),
        transcendentals=0,
        bytes_accessed=(B * C1 * S1 * x_item + B * S1 * S2 * 2
                        + B * C2 * S2 * o_item + C1 * C2 * 2))

    out = pl.pallas_call(
        _conv1x1_resize_kernel,
        out_shape=jax.ShapeDtypeStruct((B, C2, S2), out_dtype),
        grid_spec=pltpu.PrefetchScalarGridSpec(
            num_scalar_prefetch=0,
            grid=(B, nj),
            in_specs=[
                pl.BlockSpec((None, C1, S1), lambda bi, j: (bi, 0, 0)),  # X image
                pl.BlockSpec((C2, C1), lambda bi, j: (0, 0)),            # conv W
                pl.BlockSpec((S1, tn), lambda bi, j: (0, j)),            # R^T tile
                pl.BlockSpec((C2, 1), lambda bi, j: (0, 0)),             # bias
            ],
            out_specs=pl.BlockSpec((None, C2, tn), lambda bi, j: (bi, 0, j)),
            scratch_shapes=[pltpu.VMEM((C2, S1), jnp.bfloat16)],         # Z = W@X
        ),
        compiler_params=pltpu.CompilerParams(
            # j carries the per-image Z scratch -> "arbitrary"; batch stays parallel.
            dimension_semantics=("parallel", "arbitrary"),
            vmem_limit_bytes=vmem_limit,
        ),
        cost_estimate=cost,
    )(x3, w, rt, b2)
    return out.reshape(B, C2, H2, W2)


# --------------------------------------------------------------------------
# Module wrapper
# --------------------------------------------------------------------------
@functools.partial(jax.jit, static_argnames=("to_hw", "out_dtype"))
def _stitch_forward(x, w, b, rt, to_hw, out_dtype):
    if rt is not None:
        return conv1x1_resize_fused(x, w, b, rt, to_hw, out_dtype=out_dtype)
    B, C1, H, W = x.shape
    if (H, W) != to_hw:
        # Fallback (spatial too large to fuse): resize in bf16 so the big
        # intermediate is half the HBM bytes of an f32 round trip.
        x = jax.image.resize(x.astype(jnp.bfloat16), (B, C1) + tuple(to_hw),
                             method="bilinear", antialias=False)
    return conv1x1_nchw(x, w, b, out_dtype=out_dtype)


class Conv1x1StitchingLayerPallas:
    """JAX/Pallas port of Conv1x1StitchingLayer.forward (inference only)."""

    def __init__(self, from_shape, to_shape, key, out_dtype=jnp.bfloat16):
        c1, h1, w1 = from_shape
        c2, h2, w2 = to_shape
        self.from_shape = tuple(from_shape)
        self.to_shape = tuple(to_shape)
        self.out_dtype = out_dtype
        # nn.Conv2d(c1, c2, 1): weight (c2, c1, 1, 1), bias (c2,).
        # Deterministic init mimicking PyTorch's kaiming-uniform default bounds.
        kw, kb = jax.random.split(key)
        bound = 1.0 / math.sqrt(c1)                      # fan_in = c1 * 1 * 1
        weight = jax.random.uniform(kw, (c2, c1, 1, 1), jnp.float32, -bound, bound)
        bias = jax.random.uniform(kb, (c2,), jnp.float32, -bound, bound)
        self.w = weight[:, :, 0, 0]                      # (C2, C1)
        self.b = bias
        # Precompute the fused bilinear-resize operator R^T (S1, S2) so resize
        # and the 1x1 conv become two back-to-back MXU matmuls in one kernel.
        self.rt = None
        if (h1, w1) != (h2, w2) and _fused_resize_feasible(
                c1, c2, h1 * w1, h2 * w2, jnp.dtype(out_dtype).itemsize):
            rh = _bilinear_resize_matrix(h1, h2)         # (H2, H1)
            rw = _bilinear_resize_matrix(w1, w2)         # (W2, W1)
            self.rt = jnp.kron(rh, rw).T.astype(jnp.bfloat16)   # (S1, S2)
        # TODO(synk): init_by_regression (torch.linalg.lstsq) is host-side setup,
        # not part of the forward pass, so it is not ported to a kernel.
        # TODO(synk): on v7x, fp8 operands (no int8 MXU path) could further halve
        # W/X bytes for large channel counts; bf16 kept as the portable default.

    def __call__(self, x):
        # x: (B, C1, H1, W1) f32 -> (B, C2, H2, W2) out_dtype (bf16 default)
        return _stitch_forward(x, self.w, self.b, self.rt,
                               self.to_shape[1:], self.out_dtype)


def _reference_forward(layer: Conv1x1StitchingLayerPallas, x: jax.Array):
    """Pure-JAX reference (f32 resize, bf16-rounded operands, f32 accumulation)."""
    B, C1, H, W = x.shape
    h2, w2 = layer.to_shape[1:]
    if (H, W) != (h2, w2):
        x = jax.image.resize(x, (B, C1, h2, w2), method="bilinear", antialias=False)
    xr = x.astype(jnp.bfloat16).astype(jnp.float32)
    wr = layer.w.astype(jnp.bfloat16).astype(jnp.float32)
    return jnp.einsum("oc,bchw->bohw", wr, xr) + layer.b[None, :, None, None]


if __name__ == "__main__":
    key = jax.random.PRNGKey(0)
    k_x1, k_x2, k_p1, k_p2 = jax.random.split(key, 4)
    batch = 2

    # Test 1: spatial resize needed -> fused resize-as-matmul kernel path.
    from_shape, to_shape = (4, 8, 8), (6, 16, 16)
    x1 = jax.random.normal(k_x1, (batch, *from_shape), dtype=jnp.float32)
    layer1 = Conv1x1StitchingLayerPallas(from_shape, to_shape, k_p1)
    y1 = jax.block_until_ready(layer1(x1))
    assert y1.shape == (batch, *to_shape), y1.shape
    r1 = jax.block_until_ready(_reference_forward(layer1, x1))
    # bf16 MXU operands, bf16 Z/R intermediates and bf16 output -> ~1e-2 scale.
    assert jnp.allclose(y1.astype(jnp.float32), r1, atol=5e-2, rtol=2e-2), \
        float(jnp.max(jnp.abs(y1.astype(jnp.float32) - r1)))

    # Test 2: same spatial size -> plain lane-dense GEMM kernel path.
    from_shape2, to_shape2 = (8, 16, 16), (12, 16, 16)
    x2 = jax.random.normal(k_x2, (batch, *from_shape2), dtype=jnp.float32)
    layer2 = Conv1x1StitchingLayerPallas(from_shape2, to_shape2, k_p2)
    y2 = jax.block_until_ready(layer2(x2))
    assert y2.shape == (batch, *to_shape2), y2.shape
    r2 = jax.block_until_ready(_reference_forward(layer2, x2))
    assert jnp.allclose(y2.astype(jnp.float32), r2, atol=2e-2, rtol=2e-2), \
        float(jnp.max(jnp.abs(y2.astype(jnp.float32) - r2)))

    print("KERNEL_OK")
</pallas_src>

<mosaic_0001>
module attributes {stable_mosaic.version = 11 : i64} {
  func.func @_conv1x1_resize_kernel(%arg0: i32, %arg1: i32, %arg2: memref<1x4x64xf32, #tpu.memory_space<vmem>>, %arg3: memref<6x4xbf16, #tpu.memory_space<vmem>>, %arg4: memref<64x256xbf16, #tpu.memory_space<vmem>>, %arg5: memref<6x1xf32, #tpu.memory_space<vmem>>, %arg6: memref<1x6x256xbf16, #tpu.memory_space<vmem>>, %arg7: memref<6x64xbf16, #tpu.memory_space<vmem>>) attributes {dimension_semantics = [#tpu.dimension_semantics<parallel>, #tpu.dimension_semantics<arbitrary>], iteration_bounds = array<i64: 2, 1>, scalar_prefetch = 0 : i64, scratch_operands = 1 : i64, tpu.core_type = #tpu.core_type<tc>, window_params = [{transform_indices = @transform_0, window_bounds = array<i64: 1, 4, 64>}, {pipeline_mode = #tpu.pipeline_mode<synchronous>, transform_indices = @transform_1, window_bounds = array<i64: 6, 4>}, {transform_indices = @transform_2, window_bounds = array<i64: 64, 256>}, {pipeline_mode = #tpu.pipeline_mode<synchronous>, transform_indices = @transform_3, window_bounds = array<i64: 6, 1>}, {transform_indices = @transform_4, window_bounds = array<i64: 1, 6, 256>}]} {
    %c0_i32 = arith.constant 0 : i32
    %0 = arith.cmpi eq, %arg1, %c0_i32 : i32
    %1 = arith.extui %0 : i1 to i32
    %c0_i32_0 = arith.constant 0 : i32
    %2 = arith.cmpi ne, %1, %c0_i32_0 : i32
    scf.if %2 {
      %c0_9 = arith.constant 0 : index
      %c0_10 = arith.constant 0 : index
      %13 = vector.load %arg3[%c0_9, %c0_10] : memref<6x4xbf16, #tpu.memory_space<vmem>>, vector<6x4xbf16>
      %c0_11 = arith.constant 0 : index
      %c0_12 = arith.constant 0 : index
      %c0_13 = arith.constant 0 : index
      %14 = vector.load %arg2[%c0_11, %c0_12, %c0_13] : memref<1x4x64xf32, #tpu.memory_space<vmem>>, vector<1x4x64xf32>
      %15 = vector.shape_cast %14 : vector<1x4x64xf32> to vector<4x64xf32>
      %16 = arith.truncf %15 : vector<4x64xf32> to vector<4x64xbf16>
      %cst_14 = arith.constant dense<0.000000e+00> : vector<6x64xf32>
      %17 = tpu.matmul %13, %16, %cst_14 {dimension_numbers = #tpu.dot_dimension_numbers<[1], [0], [0], [1], [0, 0, 1, 1], [], []>} : vector<6x4xbf16>, vector<4x64xbf16>, vector<6x64xf32> -> vector<6x64xf32>
      %18 = arith.truncf %17 : vector<6x64xf32> to vector<6x64xbf16>
      %c0_15 = arith.constant 0 : index
      %c0_16 = arith.constant 0 : index
      %19 = vector.load %arg7[%c0_15, %c0_16] : memref<6x64xbf16, #tpu.memory_space<vmem>>, vector<6x64xbf16>
      tpu.vector_store %arg7[%c0_15, %c0_16], %18 {strides = array<i32>} : memref<6x64xbf16, #tpu.memory_space<vmem>>, vector<6x64xbf16>,
    } else {
    }
    %c0 = arith.constant 0 : index
    %c0_1 = arith.constant 0 : index
    %3 = vector.load %arg7[%c0, %c0_1] : memref<6x64xbf16, #tpu.memory_space<vmem>>, vector<6x64xbf16>
    %c0_2 = arith.constant 0 : index
    %c0_3 = arith.constant 0 : index
    %4 = vector.load %arg4[%c0_2, %c0_3] : memref<64x256xbf16, #tpu.memory_space<vmem>>, vector<64x256xbf16>
    %cst = arith.constant dense<0.000000e+00> : vector<6x256xf32>
    %5 = tpu.matmul %3, %4, %cst {dimension_numbers = #tpu.dot_dimension_numbers<[1], [0], [0], [1], [0, 0, 1, 1], [], []>} : vector<6x64xbf16>, vector<64x256xbf16>, vector<6x256xf32> -> vector<6x256xf32>
    %c0_4 = arith.constant 0 : index
    %c0_5 = arith.constant 0 : index
    %6 = vector.load %arg5[%c0_4, %c0_5] : memref<6x1xf32, #tpu.memory_space<vmem>>, vector<6x1xf32>
    %7 = vector.broadcast %6 : vector<6x1xf32> to vector<6x256xf32>
    %8 = arith.addf %5, %7 : vector<6x256xf32>
    %9 = arith.truncf %8 : vector<6x256xf32> to vector<6x256xbf16>
    %c0_6 = arith.constant 0 : index
    %c0_7 = arith.constant 0 : index
    %c0_8 = arith.constant 0 : index
    %10 = vector.load %arg6[%c0_6, %c0_7, %c0_8] : memref<1x6x256xbf16, #tpu.memory_space<vmem>>, vector<1x6x256xbf16>
    %11 = vector.shape_cast %10 : vector<1x6x256xbf16> to vector<6x256xbf16>
    %12 = vector.shape_cast %9 : vector<6x256xbf16> to vector<1x6x256xbf16>
    tpu.vector_store %arg6[%c0_6, %c0_7, %c0_8], %12 {strides = array<i32>} : memref<1x6x256xbf16, #tpu.memory_space<vmem>>, vector<1x6x256xbf16>,
    return
  }
  func.func @transform_0(%arg0: i32, %arg1: i32) -> (i32, i32, i32) {
    %c0_i32 = arith.constant 0 : i32
    %c0_i32_0 = arith.constant 0 : i32
    %c0_i32_1 = arith.constant 0 : i32
    return %arg0, %c0_i32, %c0_i32_0 : i32, i32, i32
  }
  func.func @transform_1(%arg0: i32, %arg1: i32) -> (i32, i32) {
    %c0_i32 = arith.constant 0 : i32
    %c0_i32_0 = arith.constant 0 : i32
    %c0_i32_1 = arith.constant 0 : i32
    return %c0_i32, %c0_i32_0 : i32, i32
  }
  func.func @transform_2(%arg0: i32, %arg1: i32) -> (i32, i32) {
    %c0_i32 = arith.constant 0 : i32
    %c0_i32_0 = arith.constant 0 : i32
    return %c0_i32, %arg1 : i32, i32
  }
  func.func @transform_3(%arg0: i32, %arg1: i32) -> (i32, i32) {
    %c0_i32 = arith.constant 0 : i32
    %c0_i32_0 = arith.constant 0 : i32
    %c0_i32_1 = arith.constant 0 : i32
    return %c0_i32, %c0_i32_0 : i32, i32
  }
  func.func @transform_4(%arg0: i32, %arg1: i32) -> (i32, i32, i32) {
    %c0_i32 = arith.constant 0 : i32
    %c0_i32_0 = arith.constant 0 : i32
    return %arg0, %c0_i32, %arg1 : i32, i32, i32
  }
}

</mosaic_0001>

<llo_original>
// kernel: _stitch_forward.1
$region0: #{_stitch_forward.1}
  #allocation0 [shape = 'u32[]', space=smem, size = 0x4, offset = 0x4, fixed_abs, tag = 'smem constant byte address 0x4 - core index']
  #allocation1 [shape = 'u32[144,128]{1,0:T(1,128)}', space=vmem, size = 0x12000, scoped, tag = 'internal scratch']
  #allocation2 [shape = 'bf16[6,64]{1,0:T(8,128)(2,1)}', space=vmem, size = 0x800, scoped, tag = 'scratch operand']
  %s0 = inlined_call_operand.vmem [shape: f32[2,4,64], index: 0, kind: input, shape index: {}]
  %s1 = inlined_call_operand.vmem [shape: bf16[6,4], index: 1, kind: input, shape index: {}]
  %s2 = inlined_call_operand.vmem [shape: bf16[64,256], index: 2, kind: input, shape index: {}]
  %s3 = inlined_call_operand.vmem [shape: f32[6,1], index: 3, kind: input, shape index: {}]
  %s4 = inlined_call_operand.vmem [shape: bf16[2,6,256], index: 4, kind: output, shape index: {}]
  %s5 = sld [smem:[#allocation0]]
  $region53: #{_stitch_forward.1} parent=0
    _
  %s7 = ssub.s32 1, %s5
  %s8 = scalar_select 0, %s7, %s5
  loop: start=0, step=1, limit=4
  $region2: #{_stitch_forward.1} parent=0 // loop_pre_header
    _
  $region3: #{_stitch_forward.1} parent=0 // loop_header
    %s10 = sphi 0, %s14
    %p11 = scmp.ge.s32.totalorder %s10, 4
    %s17 = sphi 0, %s29
    %s18 = sphi 0, %s25
    %s19 = sphi 0, %s17
    %s20 = sphi 0, %s18
    %s21 = sphi 0, %s19
    %s22 = sphi 0, %s20
    %s32 = sphi 0, %s34
    %s35 = sphi 0, %s32
    %s36 = sphi 0, %s35
    %s52 = sphi 0, %s36
    %s56 = sphi 0, %s56
    %s58 = sphi 0, %s56
    %s59 = sphi 0, %s58
    %s73 = sphi 0, %s59
    %s79 = sphi 0, %s81
    %s82 = sphi 0, %s79
    %s83 = sphi 0, %s82
    %s99 = sphi 0, %s83
    %s103 = sphi 0, %s103
    %s105 = sphi 0, %s103
    %s106 = sphi 0, %s105
    %s120 = sphi 0, %s106
    %s128 = sphi 0, %s130
    %s131 = sphi 0, %s128
    %s132 = sphi 0, %s131
    %s148 = sphi 0, %s132
  $region4: #{_stitch_forward.1} parent=0 // loop_header_branch
    %13 = sbr.rel (%p11) target = $region8
  $region5: #{_stitch_forward.1} parent=0 // loop_body
    %s15 = ssub.s32 %s10, 1
    %s16 = ssub.s32 %s10, 2
    %s23 = sadd.s32 1, %s18
    %p24 = scmp.ge.s32.totalorder %s23, 1
    %s25 = scalar_select %p24, 0, %s23
    %s26 = sadd.s32 1, %s17
    %s27 = scalar_select %p24, %s26, %s17
    %p28 = scmp.ge.s32.totalorder %s27, 2
    %s29 = scalar_select %p28, 0, %s27
    %s30 = ssub.s32 %s17, %s29
    %p31 = scmp.eq.s32.totalorder %s30, 0
    %s33 = sadd.s32 %s32, 1
    %s34 = scalar_select %p31, %s32, %s33
    %p37 = pneg %p31
    %p38 = scmp.eq.s32.totalorder %s10, 1
    %p39 = por %p37, %p38
    %p40 = scmp.ne.s32.totalorder %s32, %s35
    %p41 = scmp.eq.s32.totalorder %s10, 0
    %p42 = por %p40, %p41
    %p43 = scmp.ne.s32.totalorder %s32, %s35
    %p44 = scmp.eq.s32.totalorder %s15, 1
    %p45 = por %p43, %p44
    %p46 = scmp.ne.s32.totalorder %s35, %s36
    %p47 = scmp.eq.s32.totalorder %s15, 0
    %p48 = por %p46, %p47
    %p49 = scmp.ne.s32.totalorder %s35, %s36
    %p50 = scmp.eq.s32.totalorder %s16, 1
    %p51 = por %p49, %p50
    %p53 = scmp.ne.s32.totalorder %s36, %s52
    %p54 = scmp.eq.s32.totalorder %s16, 0
    %p55 = por %p53, %p54
    %s57 = sadd.s32 %s56, 1
    %p60 = scmp.eq.s32.totalorder %s10, 1
    %p61 = scmp.ne.s32.totalorder %s56, %s58
    %p62 = scmp.eq.s32.totalorder %s10, 0
    %p63 = por %p61, %p62
    %p64 = scmp.ne.s32.totalorder %s56, %s58
    %p65 = scmp.eq.s32.totalorder %s15, 1
    %p66 = por %p64, %p65
    %p67 = scmp.ne.s32.totalorder %s58, %s59
    %p68 = scmp.eq.s32.totalorder %s15, 0
    %p69 = por %p67, %p68
    %p70 = scmp.ne.s32.totalorder %s58, %s59
    %p71 = scmp.eq.s32.totalorder %s16, 1
    %p72 = por %p70, %p71
    %p74 = scmp.ne.s32.totalorder %s59, %s73
    %p75 = scmp.eq.s32.totalorder %s16, 0
    %p76 = por %p74, %p75
    %s77 = ssub.s32 %s18, %s25
    %p78 = scmp.eq.s32.totalorder %s77, 0
    %s80 = sadd.s32 %s79, 1
    %s81 = scalar_select %p78, %s79, %s80
    %p84 = pneg %p78
    %p85 = scmp.eq.s32.totalorder %s10, 1
    %p86 = por %p84, %p85
    %p87 = scmp.ne.s32.totalorder %s79, %s82
    %p88 = scmp.eq.s32.totalorder %s10, 0
    %p89 = por %p87, %p88
    %p90 = scmp.ne.s32.totalorder %s79, %s82
    %p91 = scmp.eq.s32.totalorder %s15, 1
    %p92 = por %p90, %p91
    %p93 = scmp.ne.s32.totalorder %s82, %s83
    %p94 = scmp.eq.s32.totalorder %s15, 0
    %p95 = por %p93, %p94
    %p96 = scmp.ne.s32.totalorder %s82, %s83
    %p97 = scmp.eq.s32.totalorder %s16, 1
    %p98 = por %p96, %p97
    %p100 = scmp.ne.s32.totalorder %s83, %s99
    %p101 = scmp.eq.s32.totalorder %s16, 0
    %p102 = por %p100, %p101
    %s104 = sadd.s32 %s103, 1
    %p107 = scmp.eq.s32.totalorder %s10, 1
    %p108 = scmp.ne.s32.totalorder %s103, %s105
    %p109 = scmp.eq.s32.totalorder %s10, 0
    %p110 = por %p108, %p109
    %p111 = scmp.ne.s32.totalorder %s103, %s105
    %p112 = scmp.eq.s32.totalorder %s15, 1
    %p113 = por %p111, %p112
    %p114 = scmp.ne.s32.totalorder %s105, %s106
    %p115 = scmp.eq.s32.totalorder %s15, 0
    %p116 = por %p114, %p115
    %p117 = scmp.ne.s32.totalorder %s105, %s106
    %p118 = scmp.eq.s32.totalorder %s16, 1
    %p119 = por %p117, %p118
    %p121 = scmp.ne.s32.totalorder %s106, %s120
    %p122 = scmp.eq.s32.totalorder %s16, 0
    %p123 = por %p121, %p122
    %s124 = ssub.s32 %s17, %s29
    %s125 = ssub.s32 %s18, %s25
    %s126 = sor.u32 %s124, %s125
    %p127 = scmp.eq.s32.totalorder %s126, 0
    %s129 = sadd.s32 %s128, 1
    %s130 = scalar_select %p127, %s128, %s129
    %p133 = pneg %p127
    %p134 = scmp.eq.s32.totalorder %s10, 1
    %p135 = por %p133, %p134
    %p136 = scmp.ne.s32.totalorder %s128, %s131
    %p137 = scmp.eq.s32.totalorder %s10, 0
    %p138 = por %p136, %p137
    %p139 = scmp.ne.s32.totalorder %s128, %s131
    %p140 = scmp.eq.s32.totalorder %s15, 1
    %p141 = por %p139, %p140
    %p142 = scmp.ne.s32.totalorder %s131, %s132
    %p143 = scmp.eq.s32.totalorder %s15, 0
    %p144 = por %p142, %p143
    %p145 = scmp.ne.s32.totalorder %s131, %s132
    %p146 = scmp.eq.s32.totalorder %s16, 1
    %p147 = por %p145, %p146
    %p149 = scmp.ne.s32.totalorder %s132, %s148
    %p150 = scmp.eq.s32.totalorder %s16, 0
    %p151 = por %p149, %p150
    %p152 = scmp.le.s32.totalorder 1, %s10
    %p153 = scmp.lt.s32.totalorder %s10, 3
    %p154 = pnand %p152, %p153
    %p155 = pneg %p154
    // Predicated region
    $region9: #{_stitch_forward.1} parent=5 // pred_check
      _
    $region10: #{_stitch_forward.1} parent=5 // pred_check_branch
      %157 = sbr.rel (%p154) target = $region12
    $region11: #{_stitch_forward.1} parent=5 // pred_region
      %s158 = ssub.s32 %s10, 1
      // Predicated region
      $region13: #{_stitch_forward.1} parent=11 // pred_check
        %p159 = pneg %p69
      $region14: #{_stitch_forward.1} parent=11 // pred_check_branch
        %161 = sbr.rel (%p159) target = $region16
      $region15: #{_stitch_forward.1} parent=11 // pred_region
        _
      $region16: #{_stitch_forward.1} parent=11 // pred_fallthru
        _
      // Predicated region
      $region17: #{_stitch_forward.1} parent=11 // pred_check
        %p162 = pneg %p95
      $region18: #{_stitch_forward.1} parent=11 // pred_check_branch
        %164 = sbr.rel (%p162) target = $region20
      $region19: #{_stitch_forward.1} parent=11 // pred_region
        %s165 = smul.u32 2, %s20
        %p166 = scmp.lt.s32.totalorder %s165, 1
        %s167 = scalar_select %p166, %s165, 1
        %s168 = smul.addr %s167, 4
        %s169 = scalar_lea.vmem %s2, %s168
        %s170 = smul.u32 2, %s20
      $region20: #{_stitch_forward.1} parent=11 // pred_fallthru
        _
      // Predicated region
      $region21: #{_stitch_forward.1} parent=11 // pred_check
        %p171 = pneg %p116
      $region22: #{_stitch_forward.1} parent=11 // pred_check_branch
        %173 = sbr.rel (%p171) target = $region24
      $region23: #{_stitch_forward.1} parent=11 // pred_region
        _
      $region24: #{_stitch_forward.1} parent=11 // pred_fallthru
        _
    $region12: #{_stitch_forward.1} parent=5 // pred_fallthru
      _
    %p174 = scmp.lt.s32.totalorder %s10, 2
    // Predicated region
    $region25: #{_stitch_forward.1} parent=5 // pred_check
      %p175 = pneg %p174
    $region26: #{_stitch_forward.1} parent=5 // pred_check_branch
      %177 = sbr.rel (%p175) target = $region28
    $region27: #{_stitch_forward.1} parent=5 // pred_region
      // Predicated region
      $region29: #{_stitch_forward.1} parent=27 // pred_check
        %p178 = pneg %p42
      $region30: #{_stitch_forward.1} parent=27 // pred_check_branch
        %180 = sbr.rel (%p178) target = $region32
      $region31: #{_stitch_forward.1} parent=27 // pred_region
        %p181 = scmp.lt.s32.totalorder %s17, 1
        %s182 = scalar_select %p181, %s17, 1
        %s183 = smul.addr %s182, 4
        %s184 = scalar_lea.vmem %s0, %s183
      $region32: #{_stitch_forward.1} parent=27 // pred_fallthru
        _
    $region28: #{_stitch_forward.1} parent=5 // pred_fallthru
      _
    %p185 = scmp.le.s32.totalorder 1, %s10
    %p186 = scmp.lt.s32.totalorder %s10, 3
    %p187 = pnand %p185, %p186
    %p188 = pneg %p187
    // Predicated region
    $region33: #{_stitch_forward.1} parent=5 // pred_check
      _
    $region34: #{_stitch_forward.1} parent=5 // pred_check_branch
      %190 = sbr.rel (%p187) target = $region36
    $region35: #{_stitch_forward.1} parent=5 // pred_region
      %s191 = ssub.s32 %s10, 1
      %p192 = scmp.lt.s32.totalorder %s19, 1
      %s193 = scalar_select %p192, %s19, 1
      %s194 = smul.addr %s193, 4
      %s195 = scalar_lea.vmem %s0, %s194
      %p196 = pneg %p48
      %p197 = pneg %p45
      %p198 = pneg %p69
      %p199 = pneg %p66
      %s200 = smul.u32 2, %s20
      %p201 = scmp.lt.s32.totalorder %s200, 1
      %s202 = scalar_select %p201, %s200, 1
      %s203 = smul.addr %s202, 4
      %s204 = scalar_lea.vmem %s2, %s203
      %p205 = pneg %p95
      %p206 = pneg %p92
      %p207 = pneg %p116
      %p208 = pneg %p113
      %p209 = pneg %p144
      %p210 = pneg %p141
      %s211 = smul.u32 2, %s20
      %p212 = scmp.lt.s32.totalorder %s19, 1
      %s213 = scalar_select %p212, %s19, 1
      %p214 = scmp.lt.s32.totalorder %s211, 1
      %s215 = scalar_select %p214, %s211, 1
      %s216 = smul.addr %s213, 2
      %s217 = sadd.s32 %s215, %s216
      %s218 = smul.addr %s217, 4
      %s219 = scalar_lea.vmem %s4, %s218
      %p220 = scmp.lt.s32.totalorder %s19, 1
      %s221 = scalar_select %p220, %s19, 1
      %s222 = smul.addr %s221, 4
      %s223 = scalar_lea.vmem %s0, %s222
      %s224 = smul.u32 2, %s20
      %p225 = scmp.lt.s32.totalorder %s224, 1
      %s226 = scalar_select %p225, %s224, 1
      %s227 = smul.addr %s226, 4
      %s228 = scalar_lea.vmem %s2, %s227
      %s229 = smul.u32 2, %s20
      %s230 = smul.u32 2, %s20
      %p231 = scmp.lt.s32.totalorder %s19, 1
      %s232 = scalar_select %p231, %s19, 1
      %p233 = scmp.lt.s32.totalorder %s230, 1
      %s234 = scalar_select %p233, %s230, 1
      %s235 = smul.addr %s232, 2
      %s236 = sadd.s32 %s234, %s235
      %s237 = smul.addr %s236, 4
      %s238 = scalar_lea.vmem %s4, %s237
      %s239 = smul.u32 2, %s20
      %p241 = scmp.eq.s32.totalorder %s20, 0
      // Predicated region
      $region37: #{_stitch_forward.1} parent=35 // pred_check
        %p242 = pneg %p241
      $region38: #{_stitch_forward.1} parent=35 // pred_check_branch
        %244 = sbr.rel (%p242) target = $region40
      $region39: #{_stitch_forward.1} parent=35 // pred_region
        %v245 = vld [vmem:[%s1] sm:$0x7]
        %v246 = vld [vmem:[%s223] sm:$0xf]
        %v247 = vpack.c.bf16 %v246, %v246
        %vm248 = vcmask 31744
        %v250 = vsel %vm248, %v245, 0
        %vm252 = vcmask 1041408
        %v254 = vsel %vm252, %v247, 0
        %256 = vmatprep.subr.bf16.mxu0 0
        %257 = vmatpush1.bf16.msra.mxu0 0
        %258 = vmatprep.subr.bf16.mxu0 0
        %259 = vmatpush1.bf16.msra.mxu0 0
        %260 = vmatprep.subr.bf16.mxu0 0
        %261 = vmatpush1.bf16.msra.mxu0 0
        %262 = vmatprep.subr.bf16.mxu0 0
        %263 = vmatpush1.bf16.msra.mxu0 0
        %264 = vmatprep.subr.bf16.mxu0 0
        %265 = vmatpush1.bf16.msra.mxu0 0
        %266 = vmatprep.subr.bf16.mxu0 0
        %267 = vmatpush1.bf16.msra.mxu0 0
        %268 = vmatprep.subr.bf16.mxu0 0
        %269 = vmatpush1.bf16.msra.mxu0 0
        %270 = vmatprep.subr.bf16.mxu0 0
        %271 = vmatpush1.bf16.msra.mxu0 %v254
        %272 = vmatprep.subr.bf16.mxu0 0
        %273 = vmatpush2.bf16.msra.mxu0 0
        %274 = vmatprep.subr.bf16.mxu0 0
        %275 = vmatpush2.bf16.msra.mxu0 0
        %276 = vmatprep.subr.bf16.mxu0 0
        %277 = vmatpush2.bf16.msra.mxu0 0
        %278 = vmatprep.subr.bf16.mxu0 0
        %279 = vmatpush2.bf16.msra.mxu0 0
        %280 = vmatprep.subr.bf16.mxu0 0
        %281 = vmatpush2.bf16.msra.mxu0 0
        %282 = vmatprep.subr.bf16.mxu0 0
        %283 = vmatpush2.bf16.msra.mxu0 0
        %284 = vmatprep.subr.bf16.mxu0 0
        %285 = vmatpush2.bf16.msra.mxu0 0
        %286 = vmatprep.subr.bf16.mxu0 0
        %287 = vmatpush2.bf16.msra.mxu0 0
        %288 = vmatprep.mubr.bf16.mxu0 0
        %289 = vmatmul.mubr.bf16.gmra.mxu0 %v250
        %v290 = vpop.f32.mrf.mxu0
        %v291 = vadd.f32 0.0, %v290
        %v292 = vpop.f32.mrf.mxu0
        %v293 = vpop.f32.mrf.mxu0
        %v294 = vpop.f32.mrf.mxu0
        %295 = vdwg.mxu0
        %v296 = vpack.c.bf16 %v291, %v291
        %vm297 = vcmask 518144
        %298 = vst.msk [vmem:[#allocation2] sm:$0x7] %vm297, %v296
      $region40: #{_stitch_forward.1} parent=35 // pred_fallthru
        _
      %v299 = vld [vmem:[#allocation2] sm:$0x7]
      %v300 = vld [vmem:[%s228] sm:$0xff]
      %v301 = vld [vmem:[%s228 + $0x8] sm:$0xff]
      %v302 = vld [vmem:[%s228 + $0x10] sm:$0xff]
      %v303 = vld [vmem:[%s228 + $0x18] sm:$0xff]
      %v304 = vld [vmem:[%s228 + $0x20] sm:$0xff]
      %v305 = vld [vmem:[%s228 + $0x28] sm:$0xff]
      %v306 = vld [vmem:[%s228 + $0x30] sm:$0xff]
      %v307 = vld [vmem:[%s228 + $0x38] sm:$0xff]
      %v308 = vld [vmem:[%s3] sm:$0x3f]
      %310 = vset.pattern.permute.xlu0 0
      %311 = vperm.xlu0 %310, %v308
      %v312 = vpop.permute.xlu0 %311
      %v322 = vunpack.c.l.b16 %v300
      %v323 = vunpack.c.h.b16 %v300
      %v324 = vunpack.c.l.b16 %v301
      %v325 = vunpack.c.h.b16 %v301
      %v326 = vunpack.c.l.b16 %v302
      %v327 = vunpack.c.h.b16 %v302
      %v328 = vunpack.c.l.b16 %v303
      %v329 = vunpack.c.h.b16 %v303
      %v330 = vunpack.c.l.b16 %v304
      %v331 = vunpack.c.h.b16 %v304
      %v332 = vunpack.c.l.b16 %v305
      %v333 = vunpack.c.h.b16 %v305
      %v334 = vunpack.c.l.b16 %v306
      %v335 = vunpack.c.h.b16 %v306
      %v336 = vunpack.c.l.b16 %v307
      %v337 = vunpack.c.h.b16 %v307
      %v338 = vpack.c.b16 %v324, %v322
      %v339 = vpack.c.b16 %v325, %v323
      %v340 = vpack.c.b16 %v328, %v326
      %v341 = vpack.c.b16 %v329, %v327
      %v342 = vpack.c.b16 %v332, %v330
      %v343 = vpack.c.b16 %v333, %v331
      %v344 = vpack.c.b16 %v336, %v334
      %v345 = vpack.c.b16 %v337, %v335
      %vm354 = vcmask 523264
      %v356 = vsel %vm354, %v299, 0
      %358 = vmatprep.subr.bf16.mxu0 0
      %359 = vmatpush1.bf16.msra.mxu0 0
      %360 = vmatprep.subr.bf16.mxu0 0
      %361 = vmatpush1.bf16.msra.mxu0 0
      %362 = vmatprep.subr.bf16.mxu0 0
      %363 = vmatpush1.bf16.msra.mxu0 0
      %364 = vmatprep.subr.bf16.mxu0 0
      %365 = vmatpush1.bf16.msra.mxu0 0
      %366 = vmatprep.subr.bf16.mxu0 %v345
      %367 = vmatpush1.bf16.msra.mxu0 %v344
      %368 = vmatprep.subr.bf16.mxu0 %v343
      %369 = vmatpush1.bf16.msra.mxu0 %v342
      %370 = vmatprep.subr.bf16.mxu0 %v341
      %371 = vmatpush1.bf16.msra.mxu0 %v340
      %372 = vmatprep.subr.bf16.mxu0 %v339
      %373 = vmatpush1.bf16.msra.mxu0 %v338
      %374 = vmatprep.subr.bf16.mxu0 0
      %375 = vmatpush2.bf16.msra.mxu0 0
      %376 = vmatprep.subr.bf16.mxu0 0
      %377 = vmatpush2.bf16.msra.mxu0 0
      %378 = vmatprep.subr.bf16.mxu0 0
      %379 = vmatpush2.bf16.msra.mxu0 0
      %380 = vmatprep.subr.bf16.mxu0 0
      %381 = vmatpush2.bf16.msra.mxu0 0
      %382 = vmatprep.subr.bf16.mxu0 0
      %383 = vmatpush2.bf16.msra.mxu0 0
      %384 = vmatprep.subr.bf16.mxu0 0
      %385 = vmatpush2.bf16.msra.mxu0 0
      %386 = vmatprep.subr.bf16.mxu0 0
      %387 = vmatpush2.bf16.msra.mxu0 0
      %388 = vmatprep.subr.bf16.mxu0 0
      %389 = vmatpush2.bf16.msra.mxu0 0
      %390 = vmatprep.mubr.bf16.mxu0 0
      %391 = vmatmul.mubr.bf16.gmra.mxu0 %v356
      %v392 = vpop.f32.mrf.mxu0
      %v393 = vadd.f32 %v312, %v392
      %v394 = vpop.f32.mrf.mxu0
      %v395 = vadd.f32 %v312, %v394
      %v396 = vpop.f32.mrf.mxu0
      %v397 = vpop.f32.mrf.mxu0
      %398 = vdwg.mxu0
      %v399 = vpack.c.bf16 %v393, %v393
      %v400 = vpack.c.bf16 %v395, %v395
      %v403 = vunpack.c.l.b16 %v399
      %v404 = vunpack.c.l.b16 %v400
      %v405 = vpack.c.b16 %v404, %v403
      %407 = vst [vmem:[%s238] sm:$0x77] %v405
      %s408 = smul.u32 2, %s20
      %p409 = scmp.lt.s32.totalorder %s19, 1
      %s410 = scalar_select %p409, %s19, 1
      %p411 = scmp.lt.s32.totalorder %s408, 1
      %s412 = scalar_select %p411, %s408, 1
      %s413 = smul.addr %s410, 2
      %s414 = sadd.s32 %s412, %s413
      %s415 = smul.addr %s414, 4
      %s416 = scalar_lea.vmem %s4, %s415
      // Predicated region
      $region41: #{_stitch_forward.1} parent=35 // pred_check
        %p417 = pneg %p141
      $region42: #{_stitch_forward.1} parent=35 // pred_check_branch
        %419 = sbr.rel (%p417) target = $region44
      $region43: #{_stitch_forward.1} parent=35 // pred_region
        %s420 = smul.u32 2, %s20
      $region44: #{_stitch_forward.1} parent=35 // pred_fallthru
        _
    $region36: #{_stitch_forward.1} parent=5 // pred_fallthru
      _
    %p421 = scmp.le.s32.totalorder 2, %s10
    // Predicated region
    $region45: #{_stitch_forward.1} parent=5 // pred_check
      %p422 = pneg %p421
    $region46: #{_stitch_forward.1} parent=5 // pred_check_branch
      %424 = sbr.rel (%p422) target = $region48
    $region47: #{_stitch_forward.1} parent=5 // pred_region
      %s425 = ssub.s32 %s10, 2
      // Predicated region
      $region49: #{_stitch_forward.1} parent=47 // pred_check
        %p426 = pneg %p147
      $region50: #{_stitch_forward.1} parent=47 // pred_check_branch
        %428 = sbr.rel (%p426) target = $region52
      $region51: #{_stitch_forward.1} parent=47 // pred_region
        %s429 = smul.u32 2, %s22
        %p430 = scmp.lt.s32.totalorder %s21, 1
        %s431 = scalar_select %p430, %s21, 1
        %p432 = scmp.lt.s32.totalorder %s429, 1
        %s433 = scalar_select %p432, %s429, 1
        %s434 = smul.addr %s431, 2
        %s435 = sadd.s32 %s433, %s434
        %s436 = smul.addr %s435, 4
        %s437 = scalar_lea.vmem %s4, %s436
      $region52: #{_stitch_forward.1} parent=47 // pred_fallthru
        _
    $region48: #{_stitch_forward.1} parent=5 // pred_fallthru
      _
  $region6: #{_stitch_forward.1} parent=0 // loop_footer
    %s14 = sadd.s32 1, %s10
  $region7: #{_stitch_forward.1} parent=0 // loop_footer_branch
    %9 = sbr.rel target = $region3
  $region8: #{_stitch_forward.1} parent=0 // loop_exit
    _

</llo_original>
